<compile_context>
chip_gen: v6e
topology: v6e:2x2x1
jax: 0.10.0
libtpu: 0.0.40
codegen_flags: <defaults>
</compile_context>

<pallas_src>
import math

import jax
import jax.numpy as jnp
import numpy as np
from jax.experimental import pallas as pl
from jax.experimental.pallas import tpu as pltpu


# --------------------------------------------------------------------------
# Kernel
# --------------------------------------------------------------------------
def make_decoder_layer_kernel(B, S, D, H, dh, dv, inter, eps):
    BS = B * S
    HD = H * dh
    HV = H * dv

    def mm(a_bf16, w_bf16):
        # bf16 MXU matmul with f32 accumulation.
        return jnp.dot(a_bf16, w_bf16, preferred_element_type=jnp.float32)

    def kernel(x_ref, ln_ref, wqkv_ref, ow_ref, wmlp_ref, dw_ref,
               rope_ref, hmask_ref, out_ref):
        x = x_ref[...]                                          # (BS, D) f32
        ln = ln_ref[...]                                        # (2, D)  f32

        # ---------------- input RMSNorm (f32 VPU) ----------------
        var = jnp.mean(x * x, axis=-1, keepdims=True)
        h = x * jax.lax.rsqrt(var + eps) * ln[0:1, :]
        hb = h.astype(jnp.bfloat16)

        # ------- fused q/k/v projection: one bf16 MXU matmul, then slice -----
        # columns: [q(*scale) | q(*scale)@rot | k | k@rot | v]
        qkv = mm(hb, wqkv_ref[...])                             # (BS, 4*HD+HV)
        q_base = qkv[:, 0:HD]
        q_rot = qkv[:, HD:2 * HD]
        k_base = qkv[:, 2 * HD:3 * HD]
        k_rot = qkv[:, 3 * HD:4 * HD]
        v = qkv[:, 4 * HD:4 * HD + HV]

        # ---------------- RoPE (rotate_half folded into weights) -------------
        cosf = rope_ref[:, 0:HD]
        sinf = rope_ref[:, HD:2 * HD]
        q = q_base * cosf + q_rot * sinf                        # (BS, HD)
        k = k_base * cosf + k_rot * sinf                        # (BS, HD)

        # ------------- all-(batch, head) attention, two MXU matmuls ----------
        hmq = hmask_ref[:, 0:HD]                                # (H*BS, HD)
        hmv = hmask_ref[:, HD:HD + HV]                          # (H*BS, HV)
        amask = hmask_ref[:, HD + HV:HD + HV + BS]              # (H*BS, BS)

        # replicate q across head-replicas (no concatenate copies) and restrict
        # each replica to its head's dh columns -> per-(b,h) rows of scores.
        qe = jnp.broadcast_to(q, (H, BS, HD)).reshape(H * BS, HD) * hmq

        scores = jax.lax.dot_general(
            qe.astype(jnp.bfloat16), k.astype(jnp.bfloat16),
            (((1,), (1,)), ((), ())),
            preferred_element_type=jnp.float32)                 # (H*BS, BS)
        scores = scores + amask          # causal + same-batch additive mask

        # softmax (f32), approximate reciprocal on the EUP
        scores = scores - jnp.max(scores, axis=-1, keepdims=True)
        p = jnp.exp(scores)
        p = p * pl.reciprocal(jnp.sum(p, axis=-1, keepdims=True), approx=True)

        # context for all head-replicas in one matmul, then reduce the replica
        # axis (BS is a multiple of the 8-row sublane tile -> layout-free).
        ctx_full = mm(p.astype(jnp.bfloat16), v.astype(jnp.bfloat16))  # (H*BS, HV)
        ctx = (ctx_full * hmv).reshape(H, BS, HV).sum(axis=0)          # (BS, HV)

        attn_o = mm(ctx.astype(jnp.bfloat16), ow_ref[...])             # (BS, D)
        h1 = x + attn_o                                                # residual

        # ---------------- post-attention RMSNorm (f32) ----------------
        var2 = jnp.mean(h1 * h1, axis=-1, keepdims=True)
        h2 = h1 * jax.lax.rsqrt(var2 + eps) * ln[1:2, :]
        h2b = h2.astype(jnp.bfloat16)

        # -------- CustomizedMLP: fused [gate | up | svd] matmul ---------------
        gus = mm(h2b, wmlp_ref[...])                            # (BS, 2*inter+D)
        gate = gus[:, 0:inter]
        up = gus[:, inter:2 * inter]
        svd = gus[:, 2 * inter:2 * inter + D]
        act = gate * jax.nn.sigmoid(gate)                       # SiLU (EUP)
        mlp = mm((act * up).astype(jnp.bfloat16), dw_ref[...])  # (BS, D)

        out_ref[...] = h1 + mlp + svd                           # residual

    return kernel


# --------------------------------------------------------------------------
# Wrapper (weight folding / packing, constant tables, pallas_call)
# --------------------------------------------------------------------------
def llama_decoder_layer(x, params, cos, sin, *, eps):
    B, S, D = x.shape
    H = params['num_heads']
    dh = params['head_dim']
    dv = params['v_head_dim']
    inter = params['gate_w'].shape[0]
    BS, HD, HV = B * S, H * dh, H * dv
    bf16, f32 = jnp.bfloat16, jnp.float32

    # ---- fold low-rank pairs, RoPE rotate_half, and softmax scale into the
    # weights (products in f32; single bf16 cast at the end) ----
    qw = params['q_w1'].T @ params['q_w2'].T                # (D, HD)
    kw = params['k_w1'].T @ params['k_w2'].T                # (D, HD)
    sw = params['svd_w1'].T @ params['svd_w2'].T            # (D, D)
    vw = params['v_w'].T                                    # (D, HV)

    half = dh // 2
    rot = np.zeros((dh, dh), np.float32)
    rot[half:, :half] = -np.eye(half, dtype=np.float32)
    rot[:half, half:] = np.eye(half, dtype=np.float32)
    rotbd = jnp.asarray(np.kron(np.eye(H, dtype=np.float32), rot))  # (HD, HD)

    qw_s = qw * (1.0 / math.sqrt(dh))                       # fold 1/sqrt(dh)
    wqkv = jnp.concatenate(
        [qw_s, qw_s @ rotbd, kw, kw @ rotbd, vw], axis=1).astype(bf16)  # (D,4HD+HV)
    wmlp = jnp.concatenate(
        [params['gate_w'].T, params['up_w'].T, sw], axis=1).astype(bf16)  # (D,2I+D)
    ow = params['o_w'].T.astype(bf16)                       # (HV, D)
    dw = params['down_w'].T.astype(bf16)                    # (inter, D)

    ln12 = jnp.stack([params['ln1_w'], params['ln2_w']], axis=0).astype(f32)  # (2,D)

    # RoPE tables tiled over (batch rows, packed head columns), packed [cos|sin]
    rope = jnp.concatenate(
        [jnp.tile(cos, (B, H)), jnp.tile(sin, (B, H))], axis=1).astype(f32)   # (BS,2HD)

    # head-selection masks + additive causal/same-batch mask, packed into one const
    hmq = np.zeros((H * BS, HD), np.float32)
    hmv = np.zeros((H * BS, HV), np.float32)
    for hh in range(H):
        hmq[hh * BS:(hh + 1) * BS, hh * dh:(hh + 1) * dh] = 1.0
        hmv[hh * BS:(hh + 1) * BS, hh * dv:(hh + 1) * dv] = 1.0
    b_idx = np.arange(BS) // S
    p_idx = np.arange(BS) % S
    allowed = (b_idx[:, None] == b_idx[None, :]) & (p_idx[None, :] <= p_idx[:, None])
    amask = np.where(allowed, 0.0, -1e9).astype(np.float32)              # (BS, BS)
    hmask = jnp.asarray(
        np.concatenate([hmq, hmv, np.tile(amask, (H, 1))], axis=1))      # (H*BS, HD+HV+BS)

    inputs = [x.reshape(BS, D), ln12, wqkv, ow, wmlp, dw, rope, hmask]

    kernel = make_decoder_layer_kernel(B, S, D, H, dh, dv, inter, eps)
    vmem = pl.BlockSpec(memory_space=pltpu.MemorySpace.VMEM)

    # Single program over the whole (B*S, D) slab; total footprint << VMEM.
    out2d = pl.pallas_call(
        kernel,
        out_shape=jax.ShapeDtypeStruct((BS, D), jnp.float32),
        in_specs=[vmem] * len(inputs),
        out_specs=vmem,
    )(*inputs)

    return out2d.reshape(B, S, D)


# --------------------------------------------------------------------------
# Pure-JAX reference (for verification only)
# --------------------------------------------------------------------------
def reference_decoder_layer(x, params, cos, sin, *, eps):
    B, S, D = x.shape
    H = params['num_heads']
    dh = params['head_dim']
    dv = params['v_head_dim']

    def rms(v, w):
        var = jnp.mean(v * v, axis=-1, keepdims=True)
        return v * jax.lax.rsqrt(var + eps) * w

    def rotate_half(t):
        half = t.shape[-1] // 2
        return jnp.concatenate([-t[..., half:], t[..., :half]], axis=-1)

    h = rms(x, params['ln1_w'])
    q = (h @ params['q_w1'].T) @ params['q_w2'].T
    k = (h @ params['k_w1'].T) @ params['k_w2'].T
    v = h @ params['v_w'].T

    q = q.reshape(B, S, H, dh).transpose(0, 2, 1, 3)
    k = k.reshape(B, S, H, dh).transpose(0, 2, 1, 3)
    v = v.reshape(B, S, H, dv).transpose(0, 2, 1, 3)

    c = cos[None, None]
    s = sin[None, None]
    q = q * c + rotate_half(q) * s
    k = k * c + rotate_half(k) * s

    scores = jnp.einsum('bhqd,bhkd->bhqk', q, k) / math.sqrt(dh)
    causal = jnp.where(jnp.arange(S)[:, None] >= jnp.arange(S)[None, :],
                       0.0, -1e9).astype(jnp.float32)
    scores = scores + causal[None, None]
    p = jax.nn.softmax(scores.astype(jnp.float32), axis=-1)
    ctx = jnp.einsum('bhqk,bhkd->bhqd', p, v)
    ctx = ctx.transpose(0, 2, 1, 3).reshape(B, S, H * dv)
    attn_o = ctx @ params['o_w'].T

    h1 = x + attn_o
    h2 = rms(h1, params['ln2_w'])
    gate = h2 @ params['gate_w'].T
    up = h2 @ params['up_w'].T
    mlp = (jax.nn.silu(gate) * up) @ params['down_w'].T
    svd = (h2 @ params['svd_w1'].T) @ params['svd_w2'].T
    return h1 + mlp + svd


# --------------------------------------------------------------------------
# Main
# --------------------------------------------------------------------------
if __name__ == "__main__":
    # small config implied by the module
    B, S, D = 2, 8, 32
    H = 4                      # num_attention_heads == num_key_value_heads
    dh = D // H                # head_dim = 8
    q_lowrank = 16
    k_lowrank = 16
    vo_lowrank = 16            # v_proj output dim; per-head v dim = 16 // 4 = 4
    dv = vo_lowrank // H
    mlp_lowrank = 8            # > 0 -> CustomizedMLP
    inter = 64
    eps = 1e-6
    rope_base = 10000.0

    key = jax.random.PRNGKey(0)
    ks = jax.random.split(key, 16)

    def w(k, shape, scale=0.02):
        return scale * jax.random.normal(k, shape, dtype=jnp.float32)

    params = {
        'num_heads': H, 'head_dim': dh, 'v_head_dim': dv,
        'ln1_w': jnp.ones((D,), jnp.float32) + w(ks[0], (D,), 0.05),
        'ln2_w': jnp.ones((D,), jnp.float32) + w(ks[1], (D,), 0.05),
        # attention (PyTorch (out, in) layouts)
        'q_w1': w(ks[2], (q_lowrank, D)),
        'q_w2': w(ks[3], (H * dh, q_lowrank)),
        'k_w1': w(ks[4], (k_lowrank, D)),
        'k_w2': w(ks[5], (H * dh, k_lowrank)),
        'v_w': w(ks[6], (vo_lowrank, D)),
        'o_w': w(ks[7], (D, vo_lowrank)),
        # CustomizedMLP
        'gate_w': w(ks[8], (inter, D)),
        'up_w': w(ks[9], (inter, D)),
        'down_w': w(ks[10], (D, inter)),
        'svd_w1': w(ks[11], (mlp_lowrank, D)),
        'svd_w2': w(ks[12], (D, mlp_lowrank)),
    }

    # input hidden_states (batch, seq_len, embed_dim)
    x = jax.random.normal(ks[13], (B, S, D), dtype=jnp.float32)

    # RoPE tables (position_ids = arange(S))
    inv_freq = 1.0 / (rope_base ** (np.arange(0, dh, 2, dtype=np.float32) / dh))
    t = np.arange(S, dtype=np.float32)
    freqs = np.outer(t, inv_freq)                     # (S, dh/2)
    emb = np.concatenate([freqs, freqs], axis=-1)     # (S, dh)
    cos = jnp.asarray(np.cos(emb), dtype=jnp.float32)
    sin = jnp.asarray(np.sin(emb), dtype=jnp.float32)

    # run the Pallas kernel
    out = llama_decoder_layer(x, params, cos, sin, eps=eps)
    out = jax.block_until_ready(out)

    # verify against pure-JAX f32 reference (kernel uses bf16 MXU matmuls)
    ref = reference_decoder_layer(x, params, cos, sin, eps=eps)
    ref = jax.block_until_ready(ref)
    assert out.shape == (B, S, D)
    assert np.all(np.isfinite(np.asarray(out)))
    assert np.allclose(np.asarray(out), np.asarray(ref), rtol=2e-2, atol=2e-2), \
        f"max abs diff {np.max(np.abs(np.asarray(out) - np.asarray(ref)))}"

    print("KERNEL_OK")
</pallas_src>

<mosaic_0001>
module attributes {stable_mosaic.version = 11 : i64} {
  func.func @kernel(%arg0: memref<16x32xf32, #tpu.memory_space<vmem>>, %arg1: memref<2x32xf32, #tpu.memory_space<vmem>>, %arg2: memref<32x144xbf16, #tpu.memory_space<vmem>>, %arg3: memref<16x32xbf16, #tpu.memory_space<vmem>>, %arg4: memref<32x160xbf16, #tpu.memory_space<vmem>>, %arg5: memref<64x32xbf16, #tpu.memory_space<vmem>>, %arg6: memref<16x64xf32, #tpu.memory_space<vmem>>, %arg7: memref<64x64xf32, #tpu.memory_space<vmem>>, %arg8: memref<16x32xf32, #tpu.memory_space<vmem>>) attributes {dimension_semantics = [], scalar_prefetch = 0 : i64, scratch_operands = 0 : i64, tpu.core_type = #tpu.core_type<tc>} {
    %c0 = arith.constant 0 : index
    %c0_0 = arith.constant 0 : index
    %0 = vector.load %arg0[%c0, %c0_0] : memref<16x32xf32, #tpu.memory_space<vmem>>, vector<16x32xf32>
    %c0_1 = arith.constant 0 : index
    %c0_2 = arith.constant 0 : index
    %1 = vector.load %arg1[%c0_1, %c0_2] : memref<2x32xf32, #tpu.memory_space<vmem>>, vector<2x32xf32>
    %2 = arith.mulf %0, %0 : vector<16x32xf32>
    %cst = arith.constant dense<0.000000e+00> : vector<16xf32>
    %3 = vector.multi_reduction <add>, %2, %cst [1] : vector<16x32xf32> to vector<16xf32>
    %4 = vector.shape_cast %3 : vector<16xf32> to vector<16x1xf32>
    %cst_3 = arith.constant 3.200000e+01 : f32
    %5 = vector.broadcast %cst_3 : f32 to vector<16x1xf32>
    %6 = arith.divf %4, %5 : vector<16x1xf32>
    %cst_4 = arith.constant 9.99999997E-7 : f32
    %7 = vector.broadcast %cst_4 : f32 to vector<16x1xf32>
    %8 = arith.addf %6, %7 : vector<16x1xf32>
    %9 = math.rsqrt %8 : vector<16x1xf32>
    %10 = vector.broadcast %9 : vector<16x1xf32> to vector<16x32xf32>
    %11 = arith.mulf %0, %10 : vector<16x32xf32>
    %12 = vector.extract_strided_slice %1 {offsets = [0, 0], sizes = [1, 32], strides = [1, 1]} : vector<2x32xf32> to vector<1x32xf32>
    %13 = vector.broadcast %12 : vector<1x32xf32> to vector<16x32xf32>
    %14 = arith.mulf %11, %13 : vector<16x32xf32>
    %15 = arith.truncf %14 : vector<16x32xf32> to vector<16x32xbf16>
    %c0_5 = arith.constant 0 : index
    %c0_6 = arith.constant 0 : index
    %16 = vector.load %arg2[%c0_5, %c0_6] : memref<32x144xbf16, #tpu.memory_space<vmem>>, vector<32x144xbf16>
    %cst_7 = arith.constant dense<0.000000e+00> : vector<16x144xf32>
    %17 = tpu.matmul %15, %16, %cst_7 {dimension_numbers = #tpu.dot_dimension_numbers<[1], [0], [0], [1], [0, 0, 1, 1], [], []>} : vector<16x32xbf16>, vector<32x144xbf16>, vector<16x144xf32> -> vector<16x144xf32>
    %18 = vector.extract_strided_slice %17 {offsets = [0, 0], sizes = [16, 32], strides = [1, 1]} : vector<16x144xf32> to vector<16x32xf32>
    %19 = vector.extract_strided_slice %17 {offsets = [0, 32], sizes = [16, 32], strides = [1, 1]} : vector<16x144xf32> to vector<16x32xf32>
    %20 = vector.extract_strided_slice %17 {offsets = [0, 64], sizes = [16, 32], strides = [1, 1]} : vector<16x144xf32> to vector<16x32xf32>
    %21 = vector.extract_strided_slice %17 {offsets = [0, 96], sizes = [16, 32], strides = [1, 1]} : vector<16x144xf32> to vector<16x32xf32>
    %22 = vector.extract_strided_slice %17 {offsets = [0, 128], sizes = [16, 16], strides = [1, 1]} : vector<16x144xf32> to vector<16x16xf32>
    %c0_8 = arith.constant 0 : index
    %c0_9 = arith.constant 0 : index
    %23 = vector.load %arg6[%c0_8, %c0_9] : memref<16x64xf32, #tpu.memory_space<vmem>>, vector<16x32xf32>
    %c0_10 = arith.constant 0 : index
    %c32 = arith.constant 32 : index
    %24 = vector.load %arg6[%c0_10, %c32] : memref<16x64xf32, #tpu.memory_space<vmem>>, vector<16x32xf32>
    %25 = arith.mulf %18, %23 : vector<16x32xf32>
    %26 = arith.mulf %19, %24 : vector<16x32xf32>
    %27 = arith.addf %25, %26 : vector<16x32xf32>
    %28 = arith.mulf %20, %23 : vector<16x32xf32>
    %29 = arith.mulf %21, %24 : vector<16x32xf32>
    %30 = arith.addf %28, %29 : vector<16x32xf32>
    %c0_11 = arith.constant 0 : index
    %c0_12 = arith.constant 0 : index
    %31 = vector.load %arg7[%c0_11, %c0_12] : memref<64x64xf32, #tpu.memory_space<vmem>>, vector<64x32xf32>
    %c0_13 = arith.constant 0 : index
    %c32_14 = arith.constant 32 : index
    %32 = vector.load %arg7[%c0_13, %c32_14] : memref<64x64xf32, #tpu.memory_space<vmem>>, vector<64x16xf32>
    %c0_15 = arith.constant 0 : index
    %c48 = arith.constant 48 : index
    %33 = vector.load %arg7[%c0_15, %c48] : memref<64x64xf32, #tpu.memory_space<vmem>>, vector<64x16xf32>
    %34 = vector.shape_cast %27 : vector<16x32xf32> to vector<1x16x32xf32>
    %35 = vector.broadcast %34 : vector<1x16x32xf32> to vector<4x16x32xf32>
    %36 = vector.shape_cast %35 : vector<4x16x32xf32> to vector<64x32xf32>
    %37 = arith.mulf %36, %31 : vector<64x32xf32>
    %38 = arith.truncf %37 : vector<64x32xf32> to vector<64x32xbf16>
    %39 = arith.truncf %30 : vector<16x32xf32> to vector<16x32xbf16>
    %cst_16 = arith.constant dense<0.000000e+00> : vector<64x16xf32>
    %40 = tpu.matmul %38, %39, %cst_16 {dimension_numbers = #tpu.dot_dimension_numbers<[1], [1], [0], [0], [0, 0, 1, 0], [], []>} : vector<64x32xbf16>, vector<16x32xbf16>, vector<64x16xf32> -> vector<64x16xf32>
    %41 = arith.addf %40, %33 : vector<64x16xf32>
    %cst_17 = arith.constant dense<0xFF800000> : vector<64xf32>
    %42 = vector.multi_reduction <maximumf>, %41, %cst_17 [1] : vector<64x16xf32> to vector<64xf32>
    %43 = vector.shape_cast %42 : vector<64xf32> to vector<64x1xf32>
    %44 = vector.broadcast %43 : vector<64x1xf32> to vector<64x16xf32>
    %45 = arith.subf %41, %44 : vector<64x16xf32>
    %46 = math.exp %45 : vector<64x16xf32>
    %cst_18 = arith.constant dense<0.000000e+00> : vector<64xf32>
    %47 = vector.multi_reduction <add>, %46, %cst_18 [1] : vector<64x16xf32> to vector<64xf32>
    %48 = vector.shape_cast %47 : vector<64xf32> to vector<64x1xf32>
    %49 = tpu.reciprocal %48 {approx = true} : vector<64x1xf32> -> vector<64x1xf32>
    %50 = vector.broadcast %49 : vector<64x1xf32> to vector<64x16xf32>
    %51 = arith.mulf %46, %50 : vector<64x16xf32>
    %52 = arith.truncf %51 : vector<64x16xf32> to vector<64x16xbf16>
    %53 = arith.truncf %22 : vector<16x16xf32> to vector<16x16xbf16>
    %cst_19 = arith.constant dense<0.000000e+00> : vector<64x16xf32>
    %54 = tpu.matmul %52, %53, %cst_19 {dimension_numbers = #tpu.dot_dimension_numbers<[1], [0], [0], [1], [0, 0, 1, 1], [], []>} : vector<64x16xbf16>, vector<16x16xbf16>, vector<64x16xf32> -> vector<64x16xf32>
    %55 = arith.mulf %54, %32 : vector<64x16xf32>
    %56 = vector.shape_cast %55 : vector<64x16xf32> to vector<4x16x16xf32>
    %cst_20 = arith.constant dense<0.000000e+00> : vector<16x16xf32>
    %57 = vector.multi_reduction <add>, %56, %cst_20 [0] : vector<4x16x16xf32> to vector<16x16xf32>
    %58 = arith.truncf %57 : vector<16x16xf32> to vector<16x16xbf16>
    %c0_21 = arith.constant 0 : index
    %c0_22 = arith.constant 0 : index
    %59 = vector.load %arg3[%c0_21, %c0_22] : memref<16x32xbf16, #tpu.memory_space<vmem>>, vector<16x32xbf16>
    %cst_23 = arith.constant dense<0.000000e+00> : vector<16x32xf32>
    %60 = tpu.matmul %58, %59, %cst_23 {dimension_numbers = #tpu.dot_dimension_numbers<[1], [0], [0], [1], [0, 0, 1, 1], [], []>} : vector<16x16xbf16>, vector<16x32xbf16>, vector<16x32xf32> -> vector<16x32xf32>
    %61 = arith.addf %0, %60 : vector<16x32xf32>
    %62 = arith.mulf %61, %61 : vector<16x32xf32>
    %cst_24 = arith.constant dense<0.000000e+00> : vector<16xf32>
    %63 = vector.multi_reduction <add>, %62, %cst_24 [1] : vector<16x32xf32> to vector<16xf32>
    %64 = vector.shape_cast %63 : vector<16xf32> to vector<16x1xf32>
    %cst_25 = arith.constant 3.200000e+01 : f32
    %65 = vector.broadcast %cst_25 : f32 to vector<16x1xf32>
    %66 = arith.divf %64, %65 : vector<16x1xf32>
    %cst_26 = arith.constant 9.99999997E-7 : f32
    %67 = vector.broadcast %cst_26 : f32 to vector<16x1xf32>
    %68 = arith.addf %66, %67 : vector<16x1xf32>
    %69 = math.rsqrt %68 : vector<16x1xf32>
    %70 = vector.broadcast %69 : vector<16x1xf32> to vector<16x32xf32>
    %71 = arith.mulf %61, %70 : vector<16x32xf32>
    %72 = vector.extract_strided_slice %1 {offsets = [1, 0], sizes = [1, 32], strides = [1, 1]} : vector<2x32xf32> to vector<1x32xf32>
    %73 = vector.broadcast %72 : vector<1x32xf32> to vector<16x32xf32>
    %74 = arith.mulf %71, %73 : vector<16x32xf32>
    %75 = arith.truncf %74 : vector<16x32xf32> to vector<16x32xbf16>
    %c0_27 = arith.constant 0 : index
    %c0_28 = arith.constant 0 : index
    %76 = vector.load %arg4[%c0_27, %c0_28] : memref<32x160xbf16, #tpu.memory_space<vmem>>, vector<32x160xbf16>
    %cst_29 = arith.constant dense<0.000000e+00> : vector<16x160xf32>
    %77 = tpu.matmul %75, %76, %cst_29 {dimension_numbers = #tpu.dot_dimension_numbers<[1], [0], [0], [1], [0, 0, 1, 1], [], []>} : vector<16x32xbf16>, vector<32x160xbf16>, vector<16x160xf32> -> vector<16x160xf32>
    %78 = vector.extract_strided_slice %77 {offsets = [0, 0], sizes = [16, 64], strides = [1, 1]} : vector<16x160xf32> to vector<16x64xf32>
    %79 = vector.extract_strided_slice %77 {offsets = [0, 64], sizes = [16, 64], strides = [1, 1]} : vector<16x160xf32> to vector<16x64xf32>
    %80 = vector.extract_strided_slice %77 {offsets = [0, 128], sizes = [16, 32], strides = [1, 1]} : vector<16x160xf32> to vector<16x32xf32>
    %81 = arith.negf %78 : vector<16x64xf32>
    %82 = math.exp %81 : vector<16x64xf32>
    %cst_30 = arith.constant 1.000000e+00 : f32
    %83 = vector.broadcast %cst_30 : f32 to vector<16x64xf32>
    %84 = arith.addf %83, %82 : vector<16x64xf32>
    %85 = arith.divf %83, %84 : vector<16x64xf32>
    %86 = arith.mulf %78, %85 : vector<16x64xf32>
    %87 = arith.mulf %86, %79 : vector<16x64xf32>
    %88 = arith.truncf %87 : vector<16x64xf32> to vector<16x64xbf16>
    %c0_31 = arith.constant 0 : index
    %c0_32 = arith.constant 0 : index
    %89 = vector.load %arg5[%c0_31, %c0_32] : memref<64x32xbf16, #tpu.memory_space<vmem>>, vector<64x32xbf16>
    %cst_33 = arith.constant dense<0.000000e+00> : vector<16x32xf32>
    %90 = tpu.matmul %88, %89, %cst_33 {dimension_numbers = #tpu.dot_dimension_numbers<[1], [0], [0], [1], [0, 0, 1, 1], [], []>} : vector<16x64xbf16>, vector<64x32xbf16>, vector<16x32xf32> -> vector<16x32xf32>
    %91 = arith.addf %61, %90 : vector<16x32xf32>
    %92 = arith.addf %91, %80 : vector<16x32xf32>
    %c0_34 = arith.constant 0 : index
    %c0_35 = arith.constant 0 : index
    %93 = vector.load %arg8[%c0_34, %c0_35] : memref<16x32xf32, #tpu.memory_space<vmem>>, vector<16x32xf32>
    tpu.vector_store %arg8[%c0_34, %c0_35], %92 {strides = array<i32>} : memref<16x32xf32, #tpu.memory_space<vmem>>, vector<16x32xf32>,
    return
  }
}

</mosaic_0001>

<llo_original>
// kernel: tpu_custom_call.1
$region0: #{tpu_custom_call.1}
  #allocation0 [shape = 'u32[]', space=smem, size = 0x4, offset = 0x4, fixed_abs, tag = 'smem constant byte address 0x4 - core index']
  #allocation1 [shape = 'u32[144,128]{1,0:T(1,128)}', space=vmem, size = 0x12000, scoped, tag = 'internal scratch']
  %s0 = inlined_call_operand.vmem [shape: f32[16,32], index: 0, kind: input, shape index: {}]
  %s1 = inlined_call_operand.vmem [shape: f32[2,32], index: 1, kind: input, shape index: {}]
  %s2 = inlined_call_operand.vmem [shape: bf16[32,144], index: 2, kind: input, shape index: {}]
  %s3 = inlined_call_operand.hbm [shape: bf16[16,32], index: 3, kind: input, shape index: {}]
  %s4 = inlined_call_operand.hbm [shape: bf16[32,160], index: 4, kind: input, shape index: {}]
  %s5 = inlined_call_operand.vmem [shape: bf16[64,32], index: 5, kind: input, shape index: {}]
  %s6 = inlined_call_operand.hbm [shape: f32[16,64], index: 6, kind: input, shape index: {}]
  %s7 = inlined_call_operand.hbm [shape: f32[64,64], index: 7, kind: input, shape index: {}]
  %s8 = inlined_call_operand.hbm [shape: f32[16,32], index: 8, kind: output, shape index: {}]
  %s9 = sld [smem:[#allocation0]]
  $region58: #{tpu_custom_call.1} parent=0
    _
  %s11 = ssub.s32 1, %s9
  %s12 = scalar_select 0, %s11, %s9
  $region1: #{tpu_custom_call.1} parent=0
    #allocation2 [shape = 'u8[4096]{0}', space=vmem, size = 0x1000, scoped, tag = 'input window, operand 3, single buffered']
    #allocation3 [shape = 's32[1]{0}', space=sflag, size = 0x4, scoped, tag = 'scoped memory for tpu_custom_call.1']
    #allocation4 [shape = 's32[1]{0}', space=sflag, size = 0x4, scoped, tag = 'scoped memory for tpu_custom_call.1']
    #allocation5 [shape = 'u8[16384]{0}', space=vmem, size = 0x4000, scoped, tag = 'input window, operand 4, single buffered']
    #allocation6 [shape = 's32[1]{0}', space=sflag, size = 0x4, scoped, tag = 'scoped memory for tpu_custom_call.1']
    #allocation7 [shape = 'u8[8192]{0}', space=vmem, size = 0x2000, scoped, tag = 'input window, operand 6, single buffered']
    #allocation8 [shape = 'u8[32768]{0}', space=vmem, size = 0x8000, scoped, tag = 'input window, operand 7, single buffered']
    #allocation9 [shape = 's32[1]{0}', space=sflag, size = 0x4, scoped, tag = 'scoped memory for tpu_custom_call.1']
    #allocation10 [shape = 'u8[8192]{0}', space=vmem, size = 0x2000, scoped, tag = 'output window, operand 0, single buffered']
    %13 = vsyncpa [#allocation3], 0
    %14 = vsyncpa [#allocation6], 0
    %15 = vsyncpa [#allocation9], 0
    %16 = vsyncpa [#allocation4], 0
    // Predicated region
    $region2: #{tpu_custom_call.1} parent=1 // pred_check
      _
    $region3: #{tpu_custom_call.1} parent=1 // pred_check_branch
      %18 = sbr.rel (0) target = $region5
    $region4: #{tpu_custom_call.1} parent=1 // pred_region
      _
    $region5: #{tpu_custom_call.1} parent=1 // pred_fallthru
      _
    // Predicated region
    $region6: #{tpu_custom_call.1} parent=1 // pred_check
      _
    $region7: #{tpu_custom_call.1} parent=1 // pred_check_branch
      %20 = sbr.rel (0) target = $region9
    $region8: #{tpu_custom_call.1} parent=1 // pred_region
      _
    $region9: #{tpu_custom_call.1} parent=1 // pred_fallthru
      _
    // Predicated region
    $region10: #{tpu_custom_call.1} parent=1 // pred_check
      _
    $region11: #{tpu_custom_call.1} parent=1 // pred_check_branch
      %22 = sbr.rel (0) target = $region13
    $region12: #{tpu_custom_call.1} parent=1 // pred_region
      _
    $region13: #{tpu_custom_call.1} parent=1 // pred_fallthru
      _
    // Predicated region
    $region14: #{tpu_custom_call.1} parent=1 // pred_check
      _
    $region15: #{tpu_custom_call.1} parent=1 // pred_check_branch
      %24 = sbr.rel (0) target = $region17
    $region16: #{tpu_custom_call.1} parent=1 // pred_region
      %s26 = ssub.s32 128, 128
      %27 = vsyncadd [#allocation3], %s26
      %s28 = sshll.u32 [#allocation2], 4
      %s29 = int_to_ptr.vmem [resolvable:$true] %s28
      %34 = dma.hbm_to_vmem [thread:$0]  %s3, 128, %s29, [#allocation3], 64, 64, 4
    $region17: #{tpu_custom_call.1} parent=1 // pred_fallthru
      _
    // Predicated region
    $region18: #{tpu_custom_call.1} parent=1 // pred_check
      _
    $region19: #{tpu_custom_call.1} parent=1 // pred_check_branch
      %36 = sbr.rel (0) target = $region21
    $region20: #{tpu_custom_call.1} parent=1 // pred_region
      %s38 = ssub.s32 512, 512
      %39 = vsyncadd [#allocation6], %s38
      %s40 = sshll.u32 [#allocation5], 4
      %s41 = int_to_ptr.vmem [resolvable:$true] %s40
      %46 = dma.hbm_to_vmem [thread:$0]  %s4, 512, %s41, [#allocation6], 128, 128, 8
    $region21: #{tpu_custom_call.1} parent=1 // pred_fallthru
      _
    // Predicated region
    $region22: #{tpu_custom_call.1} parent=1 // pred_check
      _
    $region23: #{tpu_custom_call.1} parent=1 // pred_check_branch
      %48 = sbr.rel (0) target = $region25
    $region24: #{tpu_custom_call.1} parent=1 // pred_region
      _
    $region25: #{tpu_custom_call.1} parent=1 // pred_fallthru
      _
    // Predicated region
    $region26: #{tpu_custom_call.1} parent=1 // pred_check
      _
    $region27: #{tpu_custom_call.1} parent=1 // pred_check_branch
      %50 = sbr.rel (0) target = $region29
    $region28: #{tpu_custom_call.1} parent=1 // pred_region
      %s52 = ssub.s32 256, 256
      %53 = vsyncadd [#allocation6], %s52
      %s54 = sshll.u32 [#allocation7], 4
      %s55 = int_to_ptr.vmem [resolvable:$true] %s54
      %60 = dma.hbm_to_vmem [thread:$0]  %s6, 256, %s55, [#allocation6], 128, 128, 8
    $region29: #{tpu_custom_call.1} parent=1 // pred_fallthru
      _
    // Predicated region
    $region30: #{tpu_custom_call.1} parent=1 // pred_check
      _
    $region31: #{tpu_custom_call.1} parent=1 // pred_check_branch
      %62 = sbr.rel (0) target = $region33
    $region32: #{tpu_custom_call.1} parent=1 // pred_region
      %s64 = ssub.s32 1024, 1024
      %65 = vsyncadd [#allocation9], %s64
      %s66 = sshll.u32 [#allocation8], 4
      %s67 = int_to_ptr.vmem [resolvable:$true] %s66
      %72 = dma.hbm_to_vmem [thread:$0]  %s7, 1024, %s67, [#allocation9], 128, 128, 8
    $region33: #{tpu_custom_call.1} parent=1 // pred_fallthru
      _
    // Predicated region
    $region34: #{tpu_custom_call.1} parent=1 // pred_check
      _
    $region35: #{tpu_custom_call.1} parent=1 // pred_check_branch
      %74 = sbr.rel (0) target = $region37
    $region36: #{tpu_custom_call.1} parent=1 // pred_region
      %75 = dma.done [#allocation3], 128
    $region37: #{tpu_custom_call.1} parent=1 // pred_fallthru
      _
    // Predicated region
    $region38: #{tpu_custom_call.1} parent=1 // pred_check
      _
    $region39: #{tpu_custom_call.1} parent=1 // pred_check_branch
      %77 = sbr.rel (0) target = $region41
    $region40: #{tpu_custom_call.1} parent=1 // pred_region
      %78 = dma.done [#allocation6], 512
    $region41: #{tpu_custom_call.1} parent=1 // pred_fallthru
      _
    // Predicated region
    $region42: #{tpu_custom_call.1} parent=1 // pred_check
      _
    $region43: #{tpu_custom_call.1} parent=1 // pred_check_branch
      %80 = sbr.rel (0) target = $region45
    $region44: #{tpu_custom_call.1} parent=1 // pred_region
      %81 = dma.done [#allocation6], 256
    $region45: #{tpu_custom_call.1} parent=1 // pred_fallthru
      _
    // Predicated region
    $region46: #{tpu_custom_call.1} parent=1 // pred_check
      _
    $region47: #{tpu_custom_call.1} parent=1 // pred_check_branch
      %83 = sbr.rel (0) target = $region49
    $region48: #{tpu_custom_call.1} parent=1 // pred_region
      %84 = dma.done [#allocation9], 1024
    $region49: #{tpu_custom_call.1} parent=1 // pred_fallthru
      _
    %v86 = vld [vmem:[%s0] sm:$0xff]
    %v87 = vld [vmem:[%s0 + $0x8] sm:$0xff]
    %v88 = vld [vmem:[%s1] sm:$0x3]
    %v89 = vmul.f32 %v86, %v86
    %v90 = vmul.f32 %v87, %v87
    %vm91 = vcmask 261120
    %v92 = vsel %vm91, %v89, 0.0
    %93 = vadd.xlane.f32.xlu0 %v92
    %v94 = vpop.xlane.xlu0 %93
    %v95 = vsel %vm91, %v90, 0.0
    %96 = vadd.xlane.f32.xlu0 %v95
    %v97 = vpop.xlane.xlu0 %96
    %v98 = vrcp.pop 32.0
    %v99 = vmul.f32 %v94, %v98
    %v100 = vmul.f32 %v97, %v98
    %v101 = vadd.f32 %v99, 1e-06
    %v102 = vadd.f32 %v100, 1e-06
    %v103 = vrsqrt.pop %v101
    %v104 = vrsqrt.pop %v102
    %v105 = vmul.f32 %v86, %v103
    %v106 = vmul.f32 %v87, %v104
    %v107 = vlaneseq
    %v108 = vshrl.u32 %v107, 7
    %v109 = vsub.s32 0, %v108
    %v110 = vrot.slane %v88, %v109
    %v111 = vmul.f32 %v105, %v110
    %v112 = vmul.f32 %v106, %v110
    %v113 = vpack.c.bf16 %v112, %v111
    %v114 = vld [vmem:[%s2] sm:$0xff]
    %v115 = vld [vmem:[%s2 + $0x8] sm:$0xff]
    %v116 = vld [vmem:[%s2 + $0x10] sm:$0xff]
    %v117 = vld [vmem:[%s2 + $0x18] sm:$0xff]
    %v122 = vunpack.c.l.b16 %v114
    %v123 = vunpack.c.h.b16 %v114
    %v124 = vunpack.c.l.b16 %v115
    %v125 = vunpack.c.h.b16 %v115
    %v126 = vunpack.c.l.b16 %v116
    %v127 = vunpack.c.h.b16 %v116
    %v128 = vunpack.c.l.b16 %v117
    %v129 = vunpack.c.h.b16 %v117
    %v130 = vpack.c.b16 %v124, %v122
    %v131 = vpack.c.b16 %v125, %v123
    %v132 = vpack.c.b16 %v128, %v126
    %v133 = vpack.c.b16 %v129, %v127
    %v139 = vsel %vm91, %v113, 0
    %141 = vmatprep.subr.bf16.mxu0 0
    %142 = vmatpush1.bf16.msra.mxu0 0
    %143 = vmatprep.subr.bf16.mxu0 0
    %144 = vmatpush1.bf16.msra.mxu0 0
    %145 = vmatprep.subr.bf16.mxu0 0
    %146 = vmatpush1.bf16.msra.mxu0 0
    %147 = vmatprep.subr.bf16.mxu0 0
    %148 = vmatpush1.bf16.msra.mxu0 0
    %149 = vmatprep.subr.bf16.mxu0 0
    %150 = vmatpush1.bf16.msra.mxu0 0
    %151 = vmatprep.subr.bf16.mxu0 0
    %152 = vmatpush1.bf16.msra.mxu0 0
    %153 = vmatprep.subr.bf16.mxu0 %v133
    %154 = vmatpush1.bf16.msra.mxu0 %v132
    %155 = vmatprep.subr.bf16.mxu0 %v131
    %156 = vmatpush1.bf16.msra.mxu0 %v130
    %157 = vmatprep.subr.bf16.mxu0 0
    %158 = vmatpush2.bf16.msra.mxu0 0
    %159 = vmatprep.subr.bf16.mxu0 0
    %160 = vmatpush2.bf16.msra.mxu0 0
    %161 = vmatprep.subr.bf16.mxu0 0
    %162 = vmatpush2.bf16.msra.mxu0 0
    %163 = vmatprep.subr.bf16.mxu0 0
    %164 = vmatpush2.bf16.msra.mxu0 0
    %165 = vmatprep.subr.bf16.mxu0 0
    %166 = vmatpush2.bf16.msra.mxu0 0
    %167 = vmatprep.subr.bf16.mxu0 0
    %168 = vmatpush2.bf16.msra.mxu0 0
    %169 = vmatprep.subr.bf16.mxu0 0
    %170 = vmatpush2.bf16.msra.mxu0 0
    %171 = vmatprep.subr.bf16.mxu0 0
    %172 = vmatpush2.bf16.msra.mxu0 0
    %173 = vmatprep.mubr.bf16.mxu0 0
    %174 = vmatmul.mubr.bf16.gmra.mxu0 %v139
    %v175 = vpop.f32.mrf.mxu0
    %v176 = vadd.f32 0.0, %v175
    %v177 = vpop.f32.mrf.mxu0
    %v178 = vadd.f32 0.0, %v177
    %v179 = vpop.f32.mrf.mxu0
    %v180 = vadd.f32 0.0, %v179
    %v181 = vpop.f32.mrf.mxu0
    %v182 = vadd.f32 0.0, %v181
    %183 = vdwg.mxu0
    %v184 = vld [vmem:[#allocation7] sm:$0xff]
    %v185 = vld [vmem:[#allocation7 + $0x8] sm:$0xff]
    %v186 = vmul.f32 %v176, %v184
    %v187 = vmul.f32 %v180, %v185
    %190 = vrot.lane.b32.xlu0 %v186, 96
    %v191 = vpop.permute.xlu0 %190
    %192 = vrot.lane.b32.xlu0 %v187, 96
    %v193 = vpop.permute.xlu0 %192
    %v196 = vadd.f32 %v186, %v191
    %v197 = vadd.f32 %v187, %v193
    %200 = vrot.lane.b32.xlu0 %v184, 64
    %v201 = vpop.permute.xlu0 %200
    %202 = vrot.lane.b32.xlu0 %v185, 64
    %v203 = vpop.permute.xlu0 %202
    %v206 = vmul.f32 %v176, %v201
    %v207 = vmul.f32 %v180, %v203
    %210 = vrot.lane.b32.xlu0 %v206, 96
    %v211 = vpop.permute.xlu0 %210
    %212 = vrot.lane.b32.xlu0 %v207, 96
    %v213 = vpop.permute.xlu0 %212
    %v216 = vadd.f32 %v206, %v211
    %v217 = vadd.f32 %v207, %v213
    %v218 = vld [vmem:[#allocation8] sm:$0xff]
    %v219 = vld [vmem:[#allocation8 + $0x8] sm:$0xff]
    %v220 = vld [vmem:[#allocation8 + $0x10] sm:$0xff]
    %v221 = vld [vmem:[#allocation8 + $0x18] sm:$0xff]
    %v222 = vld [vmem:[#allocation8 + $0x20] sm:$0xff]
    %v223 = vld [vmem:[#allocation8 + $0x28] sm:$0xff]
    %v224 = vld [vmem:[#allocation8 + $0x30] sm:$0xff]
    %v225 = vld [vmem:[#allocation8 + $0x38] sm:$0xff]
    %v226 = vmul.f32 %v196, %v218
    %v227 = vmul.f32 %v197, %v219
    %v228 = vmul.f32 %v196, %v220
    %v229 = vmul.f32 %v197, %v221
    %v230 = vmul.f32 %v196, %v222
    %v231 = vmul.f32 %v197, %v223
    %v232 = vmul.f32 %v196, %v224
    %v233 = vmul.f32 %v197, %v225
    %v234 = vpack.c.bf16 %v227, %v226
    %v235 = vpack.c.bf16 %v229, %v228
    %v236 = vpack.c.bf16 %v231, %v230
    %v237 = vpack.c.bf16 %v233, %v232
    %v238 = vpack.c.bf16 %v217, %v216
    %240 = vrot.lane.b32.xlu0 %v238, 64
    %v241 = vpop.permute.xlu0 %240
    %250 = vrot.lane.b32.xlu0 %v218, 80
    %v251 = vpop.permute.xlu0 %250
    %252 = vrot.lane.b32.xlu0 %v219, 80
    %v253 = vpop.permute.xlu0 %252
    %254 = vrot.lane.b32.xlu0 %v220, 80
    %v255 = vpop.permute.xlu0 %254
    %256 = vrot.lane.b32.xlu0 %v221, 80
    %v257 = vpop.permute.xlu0 %256
    %258 = vrot.lane.b32.xlu0 %v222, 80
    %v259 = vpop.permute.xlu0 %258
    %260 = vrot.lane.b32.xlu0 %v223, 80
    %v261 = vpop.permute.xlu0 %260
    %262 = vrot.lane.b32.xlu0 %v224, 80
    %v263 = vpop.permute.xlu0 %262
    %264 = vrot.lane.b32.xlu0 %v225, 80
    %v265 = vpop.permute.xlu0 %264
    %v275 = vsel %vm91, %v234, 0
    %v278 = vsel %vm91, %v235, 0
    %v281 = vsel %vm91, %v236, 0
    %v284 = vsel %vm91, %v237, 0
    %v287 = vsel %vm91, %v241, 0
    %289 = vmatprep.subr.bf16.mxu0 0
    %290 = vmatpush1.bf16.xpose.msra.mxu0 0
    %291 = vmatprep.subr.bf16.mxu0 0
    %292 = vmatpush1.bf16.xpose.msra.mxu0 0
    %293 = vmatprep.subr.bf16.mxu0 0
    %294 = vmatpush1.bf16.xpose.msra.mxu0 0
    %295 = vmatprep.subr.bf16.mxu0 0
    %296 = vmatpush1.bf16.xpose.msra.mxu0 0
    %297 = vmatprep.subr.bf16.mxu0 0
    %298 = vmatpush1.bf16.xpose.msra.mxu0 0
    %299 = vmatprep.subr.bf16.mxu0 0
    %300 = vmatpush1.bf16.xpose.msra.mxu0 0
    %301 = vmatprep.subr.bf16.mxu0 0
    %302 = vmatpush1.bf16.xpose.msra.mxu0 0
    %303 = vmatprep.subr.bf16.mxu0 0
    %304 = vmatpush1.bf16.xpose.msra.mxu0 %v287
    %305 = vmatprep.subr.bf16.mxu0 0
    %306 = vmatpush2.bf16.xpose.msra.mxu0 0
    %307 = vmatprep.subr.bf16.mxu0 0
    %308 = vmatpush2.bf16.xpose.msra.mxu0 0
    %309 = vmatprep.subr.bf16.mxu0 0
    %310 = vmatpush2.bf16.xpose.msra.mxu0 0
    %311 = vmatprep.subr.bf16.mxu0 0
    %312 = vmatpush2.bf16.xpose.msra.mxu0 0
    %313 = vmatprep.subr.bf16.mxu0 0
    %314 = vmatpush2.bf16.xpose.msra.mxu0 0
    %315 = vmatprep.subr.bf16.mxu0 0
    %316 = vmatpush2.bf16.xpose.msra.mxu0 0
    %317 = vmatprep.subr.bf16.mxu0 0
    %318 = vmatpush2.bf16.xpose.msra.mxu0 0
    %319 = vmatprep.subr.bf16.mxu0 0
    %320 = vmatpush2.bf16.xpose.msra.mxu0 0
    %321 = vmatprep.mubr.bf16.mxu0 0
    %322 = vmatmul.mubr.bf16.gmra.mxu0 %v275
    %v323 = vpop.f32.mrf.mxu0
    %v324 = vadd.f32 %v251, %v323
    %v325 = vpop.f32.mrf.mxu0
    %v326 = vpop.f32.mrf.mxu0
    %v327 = vadd.f32 %v253, %v326
    %v328 = vpop.f32.mrf.mxu0
    %329 = vmatprep.mubr.bf16.mxu0 0
    %330 = vmatmul.mubr.bf16.gmra.mxu0 %v278
    %v331 = vpop.f32.mrf.mxu0
    %v332 = vadd.f32 %v255, %v331
    %v333 = vpop.f32.mrf.mxu0
    %v334 = vpop.f32.mrf.mxu0
    %v335 = vadd.f32 %v257, %v334
    %v336 = vpop.f32.mrf.mxu0
    %337 = vmatprep.mubr.bf16.mxu0 0
    %338 = vmatmul.mubr.bf16.gmra.mxu0 %v281
    %v339 = vpop.f32.mrf.mxu0
    %v340 = vadd.f32 %v259, %v339
    %v341 = vpop.f32.mrf.mxu0
    %v342 = vpop.f32.mrf.mxu0
    %v343 = vadd.f32 %v261, %v342
    %v344 = vpop.f32.mrf.mxu0
    %345 = vmatprep.mubr.bf16.mxu0 0
    %346 = vmatmul.mubr.bf16.gmra.mxu0 %v284
    %v347 = vpop.f32.mrf.mxu0
    %v348 = vadd.f32 %v263, %v347
    %v349 = vpop.f32.mrf.mxu0
    %v350 = vpop.f32.mrf.mxu0
    %v351 = vadd.f32 %v265, %v350
    %v352 = vpop.f32.mrf.mxu0
    %353 = vdwg.mxu0
    %vm354 = vcmask 130048
    %v355 = vsel %vm354, %v324, -inf
    %356 = vmax.xlane.f32.xlu0 %v355
    %v357 = vpop.xlane.xlu0 %356
    %v358 = vsel %vm354, %v327, -inf
    %359 = vmax.xlane.f32.xlu0 %v358
    %v360 = vpop.xlane.xlu0 %359
    %v361 = vsel %vm354, %v332, -inf
    %362 = vmax.xlane.f32.xlu0 %v361
    %v363 = vpop.xlane.xlu0 %362
    %v364 = vsel %vm354, %v335, -inf
    %365 = vmax.xlane.f32.xlu0 %v364
    %v366 = vpop.xlane.xlu0 %365
    %v367 = vsel %vm354, %v340, -inf
    %368 = vmax.xlane.f32.xlu0 %v367
    %v369 = vpop.xlane.xlu0 %368
    %v370 = vsel %vm354, %v343, -inf
    %371 = vmax.xlane.f32.xlu0 %v370
    %v372 = vpop.xlane.xlu0 %371
    %v373 = vsel %vm354, %v348, -inf
    %374 = vmax.xlane.f32.xlu0 %v373
    %v375 = vpop.xlane.xlu0 %374
    %v376 = vsel %vm354, %v351, -inf
    %377 = vmax.xlane.f32.xlu0 %v376
    %v378 = vpop.xlane.xlu0 %377
    %v379 = vsub.f32 %v324, %v357
    %v380 = vsub.f32 %v327, %v360
    %v381 = vsub.f32 %v332, %v363
    %v382 = vsub.f32 %v335, %v366
    %v383 = vsub.f32 %v340, %v369
    %v384 = vsub.f32 %v343, %v372
    %v385 = vsub.f32 %v348, %v375
    %v386 = vsub.f32 %v351, %v378
    %v387 = vmul.f32 %v379, 1.442695
    %v388 = vpow.pop %v387
    %v389 = vmul.f32 %v380, 1.442695
    %v390 = vpow.pop %v389
    %v391 = vmul.f32 %v381, 1.442695
    %v392 = vpow.pop %v391
    %v393 = vmul.f32 %v382, 1.442695
    %v394 = vpow.pop %v393
    %v395 = vmul.f32 %v383, 1.442695
    %v396 = vpow.pop %v395
    %v397 = vmul.f32 %v384, 1.442695
    %v398 = vpow.pop %v397
    %v399 = vmul.f32 %v385, 1.442695
    %v400 = vpow.pop %v399
    %v401 = vmul.f32 %v386, 1.442695
    %v402 = vpow.pop %v401
    %v403 = vsel %vm354, %v388, 0.0
    %404 = vadd.xlane.f32.xlu0 %v403
    %v405 = vpop.xlane.xlu0 %404
    %v406 = vsel %vm354, %v390, 0.0
    %407 = vadd.xlane.f32.xlu0 %v406
    %v408 = vpop.xlane.xlu0 %407
    %v409 = vsel %vm354, %v392, 0.0
    %410 = vadd.xlane.f32.xlu0 %v409
    %v411 = vpop.xlane.xlu0 %410
    %v412 = vsel %vm354, %v394, 0.0
    %413 = vadd.xlane.f32.xlu0 %v412
    %v414 = vpop.xlane.xlu0 %413
    %v415 = vsel %vm354, %v396, 0.0
    %416 = vadd.xlane.f32.xlu0 %v415
    %v417 = vpop.xlane.xlu0 %416
    %v418 = vsel %vm354, %v398, 0.0
    %419 = vadd.xlane.f32.xlu0 %v418
    %v420 = vpop.xlane.xlu0 %419
    %v421 = vsel %vm354, %v400, 0.0
    %422 = vadd.xlane.f32.xlu0 %v421
    %v423 = vpop.xlane.xlu0 %422
    %v424 = vsel %vm354, %v402, 0.0
    %425 = vadd.xlane.f32.xlu0 %v424
    %v426 = vpop.xlane.xlu0 %425
    %v427 = vrcp.pop %v405
    %v428 = vrcp.pop %v408
    %v429 = vrcp.pop %v411
    %v430 = vrcp.pop %v414
    %v431 = vrcp.pop %v417
    %v432 = vrcp.pop %v420
    %v433 = vrcp.pop %v423
    %v434 = vrcp.pop %v426
    %v435 = vmul.f32 %v388, %v427
    %v436 = vmul.f32 %v390, %v428
    %v437 = vmul.f32 %v392, %v429
    %v438 = vmul.f32 %v394, %v430
    %v439 = vmul.f32 %v396, %v431
    %v440 = vmul.f32 %v398, %v432
    %v441 = vmul.f32 %v400, %v433
    %v442 = vmul.f32 %v402, %v434
    %v443 = vpack.c.bf16 %v436, %v435
    %v444 = vpack.c.bf16 %v438, %v437
    %v445 = vpack.c.bf16 %v440, %v439
    %v446 = vpack.c.bf16 %v442, %v441
    %v447 = vpack.c.bf16 %v182, %v178
    %v449 = vsel %vm354, %v443, 0
    %v452 = vsel %vm354, %v444, 0
    %v455 = vsel %vm354, %v445, 0
    %v458 = vsel %vm354, %v446, 0
    %460 = vmatprep.subr.bf16.mxu0 0
    %461 = vmatpush1.bf16.msra.mxu0 0
    %462 = vmatprep.subr.bf16.mxu0 0
    %463 = vmatpush1.bf16.msra.mxu0 0
    %464 = vmatprep.subr.bf16.mxu0 0
    %465 = vmatpush1.bf16.msra.mxu0 0
    %466 = vmatprep.subr.bf16.mxu0 0
    %467 = vmatpush1.bf16.msra.mxu0 0
    %468 = vmatprep.subr.bf16.mxu0 0
    %469 = vmatpush1.bf16.msra.mxu0 0
    %470 = vmatprep.subr.bf16.mxu0 0
    %471 = vmatpush1.bf16.msra.mxu0 0
    %472 = vmatprep.subr.bf16.mxu0 0
    %473 = vmatpush1.bf16.msra.mxu0 0
    %474 = vmatprep.subr.bf16.mxu0 0
    %475 = vmatpush1.bf16.msra.mxu0 %v447
    %476 = vmatprep.subr.bf16.mxu0 0
    %477 = vmatpush2.bf16.msra.mxu0 0
    %478 = vmatprep.subr.bf16.mxu0 0
    %479 = vmatpush2.bf16.msra.mxu0 0
    %480 = vmatprep.subr.bf16.mxu0 0
    %481 = vmatpush2.bf16.msra.mxu0 0
    %482 = vmatprep.subr.bf16.mxu0 0
    %483 = vmatpush2.bf16.msra.mxu0 0
    %484 = vmatprep.subr.bf16.mxu0 0
    %485 = vmatpush2.bf16.msra.mxu0 0
    %486 = vmatprep.subr.bf16.mxu0 0
    %487 = vmatpush2.bf16.msra.mxu0 0
    %488 = vmatprep.subr.bf16.mxu0 0
    %489 = vmatpush2.bf16.msra.mxu0 0
    %490 = vmatprep.subr.bf16.mxu0 0
    %491 = vmatpush2.bf16.msra.mxu0 0
    %492 = vmatprep.mubr.bf16.mxu0 0
    %493 = vmatmul.mubr.bf16.gmra.mxu0 %v449
    %v494 = vpop.f32.mrf.mxu0
    %v495 = vadd.f32 0.0, %v494
    %v496 = vpop.f32.mrf.mxu0
    %v497 = vpop.f32.mrf.mxu0
    %v498 = vadd.f32 0.0, %v497
    %v499 = vpop.f32.mrf.mxu0
    %500 = vmatprep.mubr.bf16.mxu0 0
    %501 = vmatmul.mubr.bf16.gmra.mxu0 %v452
    %v502 = vpop.f32.mrf.mxu0
    %v503 = vadd.f32 0.0, %v502
    %v504 = vpop.f32.mrf.mxu0
    %v505 = vpop.f32.mrf.mxu0
    %v506 = vadd.f32 0.0, %v505
    %v507 = vpop.f32.mrf.mxu0
    %508 = vmatprep.mubr.bf16.mxu0 0
    %509 = vmatmul.mubr.bf16.gmra.mxu0 %v455
    %v510 = vpop.f32.mrf.mxu0
    %v511 = vadd.f32 0.0, %v510
    %v512 = vpop.f32.mrf.mxu0
    %v513 = vpop.f32.mrf.mxu0
    %v514 = vadd.f32 0.0, %v513
    %v515 = vpop.f32.mrf.mxu0
    %516 = vmatprep.mubr.bf16.mxu0 0
    %517 = vmatmul.mubr.bf16.gmra.mxu0 %v458
    %v518 = vpop.f32.mrf.mxu0
    %v519 = vadd.f32 0.0, %v518
    %v520 = vpop.f32.mrf.mxu0
    %v521 = vpop.f32.mrf.mxu0
    %v522 = vadd.f32 0.0, %v521
    %v523 = vpop.f32.mrf.mxu0
    %524 = vdwg.mxu0
    %525 = vrot.lane.b32.xlu0 %v218, 96
    %v526 = vpop.permute.xlu0 %525
    %527 = vrot.lane.b32.xlu0 %v219, 96
    %v528 = vpop.permute.xlu0 %527
    %529 = vrot.lane.b32.xlu0 %v220, 96
    %v530 = vpop.permute.xlu0 %529
    %531 = vrot.lane.b32.xlu0 %v221, 96
    %v532 = vpop.permute.xlu0 %531
    %533 = vrot.lane.b32.xlu0 %v222, 96
    %v534 = vpop.permute.xlu0 %533
    %535 = vrot.lane.b32.xlu0 %v223, 96
    %v536 = vpop.permute.xlu0 %535
    %537 = vrot.lane.b32.xlu0 %v224, 96
    %v538 = vpop.permute.xlu0 %537
    %539 = vrot.lane.b32.xlu0 %v225, 96
    %v540 = vpop.permute.xlu0 %539
    %v549 = vmul.f32 %v495, %v526
    %v550 = vmul.f32 %v498, %v528
    %v551 = vmul.f32 %v503, %v530
    %v552 = vmul.f32 %v506, %v532
    %v553 = vmul.f32 %v511, %v534
    %v554 = vmul.f32 %v514, %v536
    %v555 = vmul.f32 %v519, %v538
    %v556 = vmul.f32 %v522, %v540
    %v557 = vsel %vm354, %v549, 0.0
    %v558 = vsel %vm354, %v551, 0.0
    %v559 = vadd.f32 %v557, %v558
    %v560 = vsel %vm354, %v553, 0.0
    %v561 = vadd.f32 %v559, %v560
    %v562 = vsel %vm354, %v555, 0.0
    %v563 = vadd.f32 %v561, %v562
    %v564 = vsel %vm354, %v550, 0.0
    %v565 = vsel %vm354, %v552, 0.0
    %v566 = vadd.f32 %v564, %v565
    %v567 = vsel %vm354, %v554, 0.0
    %v568 = vadd.f32 %v566, %v567
    %v569 = vsel %vm354, %v556, 0.0
    %v570 = vadd.f32 %v568, %v569
    %v571 = vpack.c.bf16 %v570, %v563
    %v572 = vld [vmem:[#allocation2] sm:$0xf]
    %v573 = vld [vmem:[#allocation2 + $0x4] sm:$0xf]
    %v576 = vunpack.c.l.b16 %v572
    %v577 = vunpack.c.l.b16 %v573
    %v578 = vpack.c.b16 %v577, %v576
    %v581 = vsel %vm354, %v571, 0
    %583 = vmatprep.subr.bf16.mxu0 0
    %584 = vmatpush1.bf16.msra.mxu0 0
    %585 = vmatprep.subr.bf16.mxu0 0
    %586 = vmatpush1.bf16.msra.mxu0 0
    %587 = vmatprep.subr.bf16.mxu0 0
    %588 = vmatpush1.bf16.msra.mxu0 0
    %589 = vmatprep.subr.bf16.mxu0 0
    %590 = vmatpush1.bf16.msra.mxu0 0
    %591 = vmatprep.subr.bf16.mxu0 0
    %592 = vmatpush1.bf16.msra.mxu0 0
    %593 = vmatprep.subr.bf16.mxu0 0
    %594 = vmatpush1.bf16.msra.mxu0 0
    %595 = vmatprep.subr.bf16.mxu0 0
    %596 = vmatpush1.bf16.msra.mxu0 0
    %597 = vmatprep.subr.bf16.mxu0 0
    %598 = vmatpush1.bf16.msra.mxu0 %v578
    %599 = vmatprep.subr.bf16.mxu0 0
    %600 = vmatpush2.bf16.msra.mxu0 0
    %601 = vmatprep.subr.bf16.mxu0 0
    %602 = vmatpush2.bf16.msra.mxu0 0
    %603 = vmatprep.subr.bf16.mxu0 0
    %604 = vmatpush2.bf16.msra.mxu0 0
    %605 = vmatprep.subr.bf16.mxu0 0
    %606 = vmatpush2.bf16.msra.mxu0 0
    %607 = vmatprep.subr.bf16.mxu0 0
    %608 = vmatpush2.bf16.msra.mxu0 0
    %609 = vmatprep.subr.bf16.mxu0 0
    %610 = vmatpush2.bf16.msra.mxu0 0
    %611 = vmatprep.subr.bf16.mxu0 0
    %612 = vmatpush2.bf16.msra.mxu0 0
    %613 = vmatprep.subr.bf16.mxu0 0
    %614 = vmatpush2.bf16.msra.mxu0 0
    %615 = vmatprep.mubr.bf16.mxu0 0
    %616 = vmatmul.mubr.bf16.gmra.mxu0 %v581
    %v617 = vpop.f32.mrf.mxu0
    %v618 = vadd.f32 0.0, %v617
    %v619 = vpop.f32.mrf.mxu0
    %v620 = vpop.f32.mrf.mxu0
    %v621 = vadd.f32 0.0, %v620
    %v622 = vpop.f32.mrf.mxu0
    %623 = vdwg.mxu0
    %v624 = vadd.f32 %v86, %v618
    %v625 = vadd.f32 %v87, %v621
    %v626 = vmul.f32 %v624, %v624
    %v627 = vmul.f32 %v625, %v625
    %v628 = vsel %vm91, %v626, 0.0
    %629 = vadd.xlane.f32.xlu0 %v628
    %v630 = vpop.xlane.xlu0 %629
    %v631 = vsel %vm91, %v627, 0.0
    %632 = vadd.xlane.f32.xlu0 %v631
    %v633 = vpop.xlane.xlu0 %632
    %v634 = vmul.f32 %v630, %v98
    %v635 = vmul.f32 %v633, %v98
    %v636 = vadd.f32 %v634, 1e-06
    %v637 = vadd.f32 %v635, 1e-06
    %v638 = vrsqrt.pop %v636
    %v639 = vrsqrt.pop %v637
    %v640 = vmul.f32 %v624, %v638
    %v641 = vmul.f32 %v625, %v639
    %v642 = vlaneseq
    %v643 = vshrl.u32 %v642, 7
    %v644 = vsub.s32 1, %v643
    %v645 = vrot.slane %v88, %v644
    %v646 = vmul.f32 %v640, %v645
    %v647 = vmul.f32 %v641, %v645
    %v648 = vpack.c.bf16 %v647, %v646
    %v649 = vld [vmem:[#allocation5] sm:$0xff]
    %v650 = vld [vmem:[#allocation5 + $0x8] sm:$0xff]
    %v651 = vld [vmem:[#allocation5 + $0x10] sm:$0xff]
    %v652 = vld [vmem:[#allocation5 + $0x18] sm:$0xff]
    %v657 = vunpack.c.l.b16 %v649
    %v658 = vunpack.c.h.b16 %v649
    %v659 = vunpack.c.l.b16 %v650
    %v660 = vunpack.c.h.b16 %v650
    %v661 = vunpack.c.l.b16 %v651
    %v662 = vunpack.c.h.b16 %v651
    %v663 = vunpack.c.l.b16 %v652
    %v664 = vunpack.c.h.b16 %v652
    %v665 = vpack.c.b16 %v659, %v657
    %v666 = vpack.c.b16 %v660, %v658
    %v667 = vpack.c.b16 %v663, %v661
    %v668 = vpack.c.b16 %v664, %v662
    %v674 = vsel %vm91, %v648, 0
    %676 = vmatprep.subr.bf16.mxu0 0
    %677 = vmatpush1.bf16.msra.mxu0 0
    %678 = vmatprep.subr.bf16.mxu0 0
    %679 = vmatpush1.bf16.msra.mxu0 0
    %680 = vmatprep.subr.bf16.mxu0 0
    %681 = vmatpush1.bf16.msra.mxu0 0
    %682 = vmatprep.subr.bf16.mxu0 0
    %683 = vmatpush1.bf16.msra.mxu0 0
    %684 = vmatprep.subr.bf16.mxu0 0
    %685 = vmatpush1.bf16.msra.mxu0 0
    %686 = vmatprep.subr.bf16.mxu0 0
    %687 = vmatpush1.bf16.msra.mxu0 0
    %688 = vmatprep.subr.bf16.mxu0 %v668
    %689 = vmatpush1.bf16.msra.mxu0 %v667
    %690 = vmatprep.subr.bf16.mxu0 %v666
    %691 = vmatpush1.bf16.msra.mxu0 %v665
    %692 = vmatprep.subr.bf16.mxu0 0
    %693 = vmatpush2.bf16.msra.mxu0 0
    %694 = vmatprep.subr.bf16.mxu0 0
    %695 = vmatpush2.bf16.msra.mxu0 0
    %696 = vmatprep.subr.bf16.mxu0 0
    %697 = vmatpush2.bf16.msra.mxu0 0
    %698 = vmatprep.subr.bf16.mxu0 0
    %699 = vmatpush2.bf16.msra.mxu0 0
    %700 = vmatprep.subr.bf16.mxu0 0
    %701 = vmatpush2.bf16.msra.mxu0 0
    %702 = vmatprep.subr.bf16.mxu0 0
    %703 = vmatpush2.bf16.msra.mxu0 0
    %704 = vmatprep.subr.bf16.mxu0 0
    %705 = vmatpush2.bf16.msra.mxu0 0
    %706 = vmatprep.subr.bf16.mxu0 0
    %707 = vmatpush2.bf16.msra.mxu0 0
    %708 = vmatprep.mubr.bf16.mxu0 0
    %709 = vmatmul.mubr.bf16.gmra.mxu0 %v674
    %v710 = vpop.f32.mrf.mxu0
    %v711 = vadd.f32 0.0, %v710
    %v712 = vpop.f32.mrf.mxu0
    %v713 = vadd.f32 0.0, %v712
    %v714 = vpop.f32.mrf.mxu0
    %v715 = vadd.f32 0.0, %v714
    %v716 = vpop.f32.mrf.mxu0
    %v717 = vadd.f32 0.0, %v716
    %718 = vdwg.mxu0
    %v719 = vxor.u32 %v711, 2147483648
    %v720 = vxor.u32 %v715, 2147483648
    %v721 = vmul.f32 %v719, 1.442695
    %v722 = vpow.pop %v721
    %v723 = vmul.f32 %v720, 1.442695
    %v724 = vpow.pop %v723
    %v725 = vadd.f32 %v722, 1.0
    %v726 = vadd.f32 %v724, 1.0
    %v727 = vrcp.pop %v725
    %v728 = vmul.f32 1.0, %v727
    %v729 = vrcp.pop %v726
    %v730 = vmul.f32 1.0, %v729
    %v731 = vmul.f32 %v711, %v728
    %v732 = vmul.f32 %v715, %v730
    %735 = vrot.lane.b32.xlu0 %v711, 64
    %v736 = vpop.permute.xlu0 %735
    %737 = vrot.lane.b32.xlu0 %v715, 64
    %v738 = vpop.permute.xlu0 %737
    %v741 = vmul.f32 %v731, %v736
    %v742 = vmul.f32 %v732, %v738
    %v743 = vpack.c.bf16 %v742, %v741
    %v744 = vld [vmem:[%s5] sm:$0xf]
    %v745 = vld [vmem:[%s5 + $0x4] sm:$0xf]
    %v746 = vld [vmem:[%s5 + $0x8] sm:$0xf]
    %v747 = vld [vmem:[%s5 + $0xc] sm:$0xf]
    %v748 = vld [vmem:[%s5 + $0x10] sm:$0xf]
    %v749 = vld [vmem:[%s5 + $0x14] sm:$0xf]
    %v750 = vld [vmem:[%s5 + $0x18] sm:$0xf]
    %v751 = vld [vmem:[%s5 + $0x1c] sm:$0xf]
    %v760 = vunpack.c.l.b16 %v744
    %v761 = vunpack.c.l.b16 %v745
    %v762 = vunpack.c.l.b16 %v746
    %v763 = vunpack.c.l.b16 %v747
    %v764 = vunpack.c.l.b16 %v748
    %v765 = vunpack.c.l.b16 %v749
    %v766 = vunpack.c.l.b16 %v750
    %v767 = vunpack.c.l.b16 %v751
    %v768 = vpack.c.b16 %v761, %v760
    %v769 = vpack.c.b16 %v763, %v762
    %v770 = vpack.c.b16 %v765, %v764
    %v771 = vpack.c.b16 %v767, %v766
    %vm776 = vcmask 523264
    %v778 = vsel %vm776, %v743, 0
    %780 = vmatprep.subr.bf16.mxu0 0
    %781 = vmatpush1.bf16.msra.mxu0 0
    %782 = vmatprep.subr.bf16.mxu0 0
    %783 = vmatpush1.bf16.msra.mxu0 0
    %784 = vmatprep.subr.bf16.mxu0 0
    %785 = vmatpush1.bf16.msra.mxu0 0
    %786 = vmatprep.subr.bf16.mxu0 0
    %787 = vmatpush1.bf16.msra.mxu0 0
    %788 = vmatprep.subr.bf16.mxu0 0
    %789 = vmatpush1.bf16.msra.mxu0 %v771
    %790 = vmatprep.subr.bf16.mxu0 0
    %791 = vmatpush1.bf16.msra.mxu0 %v770
    %792 = vmatprep.subr.bf16.mxu0 0
    %793 = vmatpush1.bf16.msra.mxu0 %v769
    %794 = vmatprep.subr.bf16.mxu0 0
    %795 = vmatpush1.bf16.msra.mxu0 %v768
    %796 = vmatprep.subr.bf16.mxu0 0
    %797 = vmatpush2.bf16.msra.mxu0 0
    %798 = vmatprep.subr.bf16.mxu0 0
    %799 = vmatpush2.bf16.msra.mxu0 0
    %800 = vmatprep.subr.bf16.mxu0 0
    %801 = vmatpush2.bf16.msra.mxu0 0
    %802 = vmatprep.subr.bf16.mxu0 0
    %803 = vmatpush2.bf16.msra.mxu0 0
    %804 = vmatprep.subr.bf16.mxu0 0
    %805 = vmatpush2.bf16.msra.mxu0 0
    %806 = vmatprep.subr.bf16.mxu0 0
    %807 = vmatpush2.bf16.msra.mxu0 0
    %808 = vmatprep.subr.bf16.mxu0 0
    %809 = vmatpush2.bf16.msra.mxu0 0
    %810 = vmatprep.subr.bf16.mxu0 0
    %811 = vmatpush2.bf16.msra.mxu0 0
    %812 = vmatprep.mubr.bf16.mxu0 0
    %813 = vmatmul.mubr.bf16.gmra.mxu0 %v778
    %v814 = vpop.f32.mrf.mxu0
    %v815 = vadd.f32 0.0, %v814
    %v816 = vpop.f32.mrf.mxu0
    %v817 = vpop.f32.mrf.mxu0
    %v818 = vadd.f32 0.0, %v817
    %v819 = vpop.f32.mrf.mxu0
    %820 = vdwg.mxu0
    %v821 = vadd.f32 %v624, %v815
    %v822 = vadd.f32 %v625, %v818
    %v823 = vadd.f32 %v821, %v713
    %v824 = vadd.f32 %v822, %v717
    %825 = vst.msk [vmem:[#allocation10] sm:$0xff] %vm91, %v823
    %826 = vst.msk [vmem:[#allocation10 + $0x8] sm:$0xff] %vm91, %v824
    // Predicated region
    $region50: #{tpu_custom_call.1} parent=1 // pred_check
      _
    $region51: #{tpu_custom_call.1} parent=1 // pred_check_branch
      %828 = sbr.rel (0) target = $region53
    $region52: #{tpu_custom_call.1} parent=1 // pred_region
      %s830 = ssub.s32 256, 256
      %831 = vsyncadd [#allocation4], %s830
      %s832 = sshll.u32 [#allocation10], 4
      %s833 = int_to_ptr.vmem [resolvable:$true] %s832
      %838 = dma.vmem_to_hbm [thread:$0]  %s833, 256, %s8, [#allocation4], 128, 128, 8
    $region53: #{tpu_custom_call.1} parent=1 // pred_fallthru
      _
    // Predicated region
    $region54: #{tpu_custom_call.1} parent=1 // pred_check
      _
    $region55: #{tpu_custom_call.1} parent=1 // pred_check_branch
      %840 = sbr.rel (0) target = $region57
    $region56: #{tpu_custom_call.1} parent=1 // pred_region
      %841 = dma.done [#allocation4], 256
    $region57: #{tpu_custom_call.1} parent=1 // pred_fallthru
      _
    %842 = vsyncpa [#allocation3], 1
    %843 = vsyncpa [#allocation6], 1
    %844 = vsyncpa [#allocation9], 1
    %845 = vsyncpa [#allocation4], 1

</llo_original>
